<compile_context>
chip_gen: v7x
topology: tpu7x:2x2x1
jax: 0.10.0
libtpu: 0.0.40
codegen_flags: <defaults>
</compile_context>

<pallas_src>
import functools

import jax
import jax.numpy as jnp
from jax import lax
from jax.experimental import pallas as pl
from jax.experimental.pallas import tpu as pltpu


def _round_up(x, m):
    return -(-x // m) * m


def _sigmoid_store(scores_f32, o_ref):
    # bf16 output -> bf16 sigmoid (doubles EUP throughput on v6e/v7x, keeps the
    # kernel DMA-bound); otherwise keep the exact f32 sigmoid.
    if o_ref.dtype == jnp.bfloat16:
        o_ref[...] = jax.nn.sigmoid(scores_f32.astype(jnp.bfloat16))
    else:
        o_ref[...] = jax.nn.sigmoid(scores_f32).astype(o_ref.dtype)


def _ipd_kernel_streamed(zrow_ref, zt_ref, o_ref):
    # zrow_ref: (tm, D)  row tile of z          (resident across j)
    # zt_ref:   (D, tn)  lane-dense tile of z.T (streamed along j)
    # o_ref:    (tm, tn) output tile of adj
    scores = lax.dot_general(
        zrow_ref[...],
        zt_ref[...],
        dimension_numbers=(((1,), (0,)), ((), ())),   # z @ z.T, MXU-native [M,K]x[K,N]
        preferred_element_type=jnp.float32,
    )
    _sigmoid_store(scores, o_ref)


def _ipd_kernel_resident(zrow_ref, zt_ref, o_ref, *, tn):
    # zt_ref: (D, N) full z.T, VMEM-resident (constant index map -> DMA'd once).
    j = pl.program_id(1)
    col = pl.multiple_of(j * tn, 128)
    scores = lax.dot_general(
        zrow_ref[...],
        zt_ref[:, pl.ds(col, tn)],
        dimension_numbers=(((1,), (0,)), ((), ())),
        preferred_element_type=jnp.float32,
    )
    _sigmoid_store(scores, o_ref)


@functools.partial(
    jax.jit,
    static_argnames=("dropout", "training", "tm", "tn", "out_dtype", "resident_cols"),
)
def inner_product_decoder(
    z,
    *,
    dropout=0.0,
    training=False,
    rng_key=None,
    tm=512,
    tn=512,
    out_dtype=jnp.bfloat16,     # perf default; pass jnp.float32 for exact match
    resident_cols=None,         # None = auto (resident z.T if it is small)
):
    """adj = sigmoid(dropout(z) @ dropout(z).T), tiled on the TPU MXU."""
    N, D = z.shape
    out_dtype = jnp.dtype(out_dtype)

    # Dropout on z (F.dropout semantics: identity in eval, inverted-scaled mask in
    # train; the same dropped z feeds both operands, as in InnerProductDecoder).
    if training and dropout > 0.0:
        if rng_key is None:
            raise ValueError("rng_key is required for training-mode dropout")
        keep = 1.0 - dropout
        mask = jax.random.bernoulli(rng_key, keep, z.shape)
        z = jnp.where(mask, z / keep, jnp.zeros_like(z)).astype(z.dtype)

    # ---- tile selection --------------------------------------------------------
    sub_min = 16 if out_dtype.itemsize < 4 else 8   # bf16 out packs 16 sublanes/vreg
    tm = min(tm, N)
    tn = min(tn, N)
    # v7x: keep >= 2 tiles on the leading parallel axis so both TCs get work.
    while (
        N // tm < 2
        and tm % 2 == 0
        and (tm // 2) >= sub_min
        and (tm // 2) % sub_min == 0
        and N % (tm // 2) == 0
    ):
        tm //= 2
    assert N % tm == 0 and tm % sub_min == 0, (
        f"tm={tm} must divide N={N} and be a multiple of {sub_min}"
    )
    assert N % tn == 0 and tn % 128 == 0, (
        f"tn={tn} must divide N={N} and be a multiple of 128 (lane-dense stores)"
    )

    # One-time wrapper transpose: lane-dense (D, N) operand, MXU-native [K, N].
    zt = z.T

    # Resident vs streamed column operand.
    zt_pad_bytes = _round_up(D, 8) * _round_up(N, 128) * z.dtype.itemsize
    if resident_cols is None:
        resident_cols = zt_pad_bytes <= (4 << 20)

    grid = (N // tm, N // tn)
    if resident_cols:
        kernel = functools.partial(_ipd_kernel_resident, tn=tn)
        zt_spec = pl.BlockSpec((D, N), lambda i, j: (0, 0))     # DMA'd once, reused
    else:
        kernel = _ipd_kernel_streamed
        zt_spec = pl.BlockSpec((D, tn), lambda i, j: (0, j))

    # ---- VMEM budget (raise the scoped limit only when big tiles need it) ------
    out_tile_bytes = 2 * tm * tn * out_dtype.itemsize                       # dbl-buf
    row_tile_bytes = 2 * tm * _round_up(D, 128) * z.dtype.itemsize          # dbl-buf
    col_bytes = (
        2 * zt_pad_bytes
        if resident_cols
        else 2 * _round_up(D, 8) * tn * z.dtype.itemsize
    )
    vmem_needed = out_tile_bytes + row_tile_bytes + col_bytes + (2 << 20)
    compiler_kwargs = {}
    if vmem_needed > (16 << 20):
        # v5e scoped default is 16 MiB (128 MiB physical); v6e/v7x default 32 MiB.
        # NOTE: on v7x (64 MiB physical VMEM) keep tiles such that this stays
        # well under ~48 MiB — do not tune tm/tn on v6e and reuse blindly.
        compiler_kwargs["vmem_limit_bytes"] = int(min(vmem_needed, 96 << 20))

    return pl.pallas_call(
        kernel,
        out_shape=jax.ShapeDtypeStruct((N, N), out_dtype),
        grid_spec=pltpu.PrefetchScalarGridSpec(
            num_scalar_prefetch=0,
            grid=grid,
            in_specs=[
                # Row tile: block index independent of j -> resident across the
                # inner axis, no re-DMA per column tile.
                pl.BlockSpec((tm, D), lambda i, j: (i, 0)),
                zt_spec,
            ],
            out_specs=pl.BlockSpec((tm, tn), lambda i, j: (i, j)),
        ),
        compiler_params=pltpu.CompilerParams(
            dimension_semantics=("parallel", "parallel"),
            **compiler_kwargs,
        ),
    )(z, zt)


if __name__ == "__main__":
    key = jax.random.PRNGKey(0)
    N, D = 256, 32  # small synthetic latent matrix (nodes x hidden)
    z = jax.random.normal(key, (N, D), dtype=jnp.float32)
    ref = jax.nn.sigmoid(z @ z.T)

    # 1) Performance defaults: bf16 output, resident z.T (auto at this size).
    adj_bf16 = inner_product_decoder(z, dropout=0.5, training=False)
    adj_bf16 = jax.block_until_ready(adj_bf16)
    assert adj_bf16.shape == (N, N) and adj_bf16.dtype == jnp.bfloat16
    assert jnp.allclose(adj_bf16.astype(jnp.float32), ref, atol=1e-2)

    # 2) Exact-match mode: f32 output, streamed column tiles (other kernel path).
    adj_f32 = inner_product_decoder(
        z, dropout=0.5, training=False, out_dtype=jnp.float32, resident_cols=False
    )
    adj_f32 = jax.block_until_ready(adj_f32)
    assert adj_f32.dtype == jnp.float32
    assert jnp.allclose(adj_f32, ref, atol=1e-5, rtol=1e-5)

    # 3) Training-mode dropout path (mask is random: shape / finiteness only).
    adj_tr = inner_product_decoder(
        z, dropout=0.5, training=True, rng_key=jax.random.PRNGKey(1)
    )
    adj_tr = jax.block_until_ready(adj_tr)
    assert adj_tr.shape == (N, N)
    assert bool(jnp.all(jnp.isfinite(adj_tr.astype(jnp.float32))))

    print("KERNEL_OK")
</pallas_src>

<mosaic_0001>
module attributes {stable_mosaic.version = 11 : i64} {
  func.func @_ipd_kernel_resident(%arg0: i32, %arg1: i32, %arg2: memref<128x32xf32, #tpu.memory_space<vmem>>, %arg3: memref<32x256xf32, #tpu.memory_space<vmem>>, %arg4: memref<128x256xbf16, #tpu.memory_space<vmem>>) attributes {dimension_semantics = [#tpu.dimension_semantics<parallel>, #tpu.dimension_semantics<parallel>], iteration_bounds = array<i64: 2, 1>, scalar_prefetch = 0 : i64, scratch_operands = 0 : i64, tpu.core_type = #tpu.core_type<tc>, window_params = [{transform_indices = @transform_0, window_bounds = array<i64: 128, 32>}, {pipeline_mode = #tpu.pipeline_mode<synchronous>, transform_indices = @transform_1, window_bounds = array<i64: 32, 256>}, {transform_indices = @transform_2, window_bounds = array<i64: 128, 256>}]} {
    %c256_i32 = arith.constant 256 : i32
    %0 = arith.muli %arg1, %c256_i32 : i32
    %1 = tpu.assume_multiple %0, 128 : i32
    %c0 = arith.constant 0 : index
    %c0_0 = arith.constant 0 : index
    %2 = vector.load %arg2[%c0, %c0_0] : memref<128x32xf32, #tpu.memory_space<vmem>>, vector<128x32xf32>
    %c0_1 = arith.constant 0 : index
    %3 = arith.index_cast %1 : i32 to index
    %4 = vector.load %arg3[%c0_1, %3] : memref<32x256xf32, #tpu.memory_space<vmem>>, vector<32x256xf32>
    %cst = arith.constant dense<0.000000e+00> : vector<128x256xf32>
    %5 = tpu.matmul %2, %4, %cst {dimension_numbers = #tpu.dot_dimension_numbers<[1], [0], [0], [1], [0, 0, 1, 1], [], []>} : vector<128x32xf32>, vector<32x256xf32>, vector<128x256xf32> -> vector<128x256xf32>
    %6 = arith.truncf %5 : vector<128x256xf32> to vector<128x256xbf16>
    %7 = arith.negf %6 : vector<128x256xbf16>
    %8 = math.exp %7 : vector<128x256xbf16>
    %cst_2 = arith.constant 1.000000e+00 : bf16
    %9 = vector.broadcast %cst_2 : bf16 to vector<128x256xbf16>
    %10 = arith.addf %9, %8 : vector<128x256xbf16>
    %11 = arith.divf %9, %10 : vector<128x256xbf16>
    %c0_3 = arith.constant 0 : index
    %c0_4 = arith.constant 0 : index
    %12 = vector.load %arg4[%c0_3, %c0_4] : memref<128x256xbf16, #tpu.memory_space<vmem>>, vector<128x256xbf16>
    tpu.vector_store %arg4[%c0_3, %c0_4], %11 {strides = array<i32>} : memref<128x256xbf16, #tpu.memory_space<vmem>>, vector<128x256xbf16>,
    return
  }
  func.func @transform_0(%arg0: i32, %arg1: i32) -> (i32, i32) {
    %c0_i32 = arith.constant 0 : i32
    %c0_i32_0 = arith.constant 0 : i32
    return %arg0, %c0_i32 : i32, i32
  }
  func.func @transform_1(%arg0: i32, %arg1: i32) -> (i32, i32) {
    %c0_i32 = arith.constant 0 : i32
    %c0_i32_0 = arith.constant 0 : i32
    %c0_i32_1 = arith.constant 0 : i32
    return %c0_i32, %c0_i32_0 : i32, i32
  }
  func.func @transform_2(%arg0: i32, %arg1: i32) -> (i32, i32) {
    %c0_i32 = arith.constant 0 : i32
    return %arg0, %arg1 : i32, i32
  }
}

</mosaic_0001>

<llo_original>
// kernel: inner_product_decoder.1
$region0: #{inner_product_decoder.1}
  #allocation0 [shape = 'u32[]', space=smem, size = 0x4, offset = 0x4, fixed_abs, tag = 'smem constant byte address 0x4 - core index']
  #allocation1 [shape = 'u32[144,128]{1,0:T(1,128)}', space=vmem, size = 0x12000, scoped, tag = 'internal scratch']
  %s0 = inlined_call_operand.vmem [shape: f32[256,32], index: 0, kind: input, shape index: {}]
  %s1 = inlined_call_operand.vmem [shape: f32[32,256], index: 1, kind: input, shape index: {}]
  %s2 = inlined_call_operand.hbm [shape: bf16[256,256], index: 2, kind: output, shape index: {}]
  %s3 = sld [smem:[#allocation0]]
  $region41: #{inner_product_decoder.1} parent=0
    _
  %s5 = ssub.s32 1, %s3
  %s6 = scalar_select 0, %s5, %s3
  $region1: #{inner_product_decoder.1} parent=0
    #allocation2 [shape = 'u8[131072]{0}', space=vmem, size = 0x20000, scoped, tag = 'output window, operand 0']
    #allocation3 [shape = 's32[2]{0}', space=sflag, size = 0x8, scoped, tag = 'scoped memory for inner_product_decoder.1']
    %7 = vsyncpa [#allocation3], 0
    %s8 = scalar_lea.sflag [#allocation3], 1
    %9 = vsyncpa %s8, 0
    loop: start=0, step=1, limit=4
    $region2: #{inner_product_decoder.1} parent=1 // loop_pre_header
      _
    $region3: #{inner_product_decoder.1} parent=1 // loop_header
      %s11 = sphi 0, %s15
      %p12 = scmp.ge.s32.totalorder %s11, 4
      %s18 = sphi 0, %s30
      %s19 = sphi 0, %s26
      %s20 = sphi 0, %s18
      %s21 = sphi 0, %s19
      %s22 = sphi 0, %s20
      %s23 = sphi 0, %s21
      %s33 = sphi 0, %s35
      %s36 = sphi 0, %s33
      %s37 = sphi 0, %s36
      %s53 = sphi 0, %s37
      %s57 = sphi 0, %s57
      %s59 = sphi 0, %s57
      %s60 = sphi 0, %s59
      %s74 = sphi 0, %s60
      %s82 = sphi 0, %s84
      %s85 = sphi 0, %s82
      %s86 = sphi 0, %s85
      %s102 = sphi 0, %s86
    $region4: #{inner_product_decoder.1} parent=1 // loop_header_branch
      %14 = sbr.rel (%p12) target = $region8
    $region5: #{inner_product_decoder.1} parent=1 // loop_body
      %s16 = ssub.s32 %s11, 1
      %s17 = ssub.s32 %s11, 2
      %s24 = sadd.s32 1, %s19
      %p25 = scmp.ge.s32.totalorder %s24, 1
      %s26 = scalar_select %p25, 0, %s24
      %s27 = sadd.s32 1, %s18
      %s28 = scalar_select %p25, %s27, %s18
      %p29 = scmp.ge.s32.totalorder %s28, 2
      %s30 = scalar_select %p29, 0, %s28
      %s31 = ssub.s32 %s18, %s30
      %p32 = scmp.eq.s32.totalorder %s31, 0
      %s34 = sadd.s32 %s33, 1
      %s35 = scalar_select %p32, %s33, %s34
      %p38 = pneg %p32
      %p39 = scmp.eq.s32.totalorder %s11, 1
      %p40 = por %p38, %p39
      %p41 = scmp.ne.s32.totalorder %s33, %s36
      %p42 = scmp.eq.s32.totalorder %s11, 0
      %p43 = por %p41, %p42
      %p44 = scmp.ne.s32.totalorder %s33, %s36
      %p45 = scmp.eq.s32.totalorder %s16, 1
      %p46 = por %p44, %p45
      %p47 = scmp.ne.s32.totalorder %s36, %s37
      %p48 = scmp.eq.s32.totalorder %s16, 0
      %p49 = por %p47, %p48
      %p50 = scmp.ne.s32.totalorder %s36, %s37
      %p51 = scmp.eq.s32.totalorder %s17, 1
      %p52 = por %p50, %p51
      %p54 = scmp.ne.s32.totalorder %s37, %s53
      %p55 = scmp.eq.s32.totalorder %s17, 0
      %p56 = por %p54, %p55
      %s58 = sadd.s32 %s57, 1
      %p61 = scmp.eq.s32.totalorder %s11, 1
      %p62 = scmp.ne.s32.totalorder %s57, %s59
      %p63 = scmp.eq.s32.totalorder %s11, 0
      %p64 = por %p62, %p63
      %p65 = scmp.ne.s32.totalorder %s57, %s59
      %p66 = scmp.eq.s32.totalorder %s16, 1
      %p67 = por %p65, %p66
      %p68 = scmp.ne.s32.totalorder %s59, %s60
      %p69 = scmp.eq.s32.totalorder %s16, 0
      %p70 = por %p68, %p69
      %p71 = scmp.ne.s32.totalorder %s59, %s60
      %p72 = scmp.eq.s32.totalorder %s17, 1
      %p73 = por %p71, %p72
      %p75 = scmp.ne.s32.totalorder %s60, %s74
      %p76 = scmp.eq.s32.totalorder %s17, 0
      %p77 = por %p75, %p76
      %s78 = ssub.s32 %s18, %s30
      %s79 = ssub.s32 %s19, %s26
      %s80 = sor.u32 %s78, %s79
      %p81 = scmp.eq.s32.totalorder %s80, 0
      %s83 = sadd.s32 %s82, 1
      %s84 = scalar_select %p81, %s82, %s83
      %p87 = pneg %p81
      %p88 = scmp.eq.s32.totalorder %s11, 1
      %p89 = por %p87, %p88
      %p90 = scmp.ne.s32.totalorder %s82, %s85
      %p91 = scmp.eq.s32.totalorder %s11, 0
      %p92 = por %p90, %p91
      %p93 = scmp.ne.s32.totalorder %s82, %s85
      %p94 = scmp.eq.s32.totalorder %s16, 1
      %p95 = por %p93, %p94
      %p96 = scmp.ne.s32.totalorder %s85, %s86
      %p97 = scmp.eq.s32.totalorder %s16, 0
      %p98 = por %p96, %p97
      %p99 = scmp.ne.s32.totalorder %s85, %s86
      %p100 = scmp.eq.s32.totalorder %s17, 1
      %p101 = por %p99, %p100
      %p103 = scmp.ne.s32.totalorder %s86, %s102
      %p104 = scmp.eq.s32.totalorder %s17, 0
      %p105 = por %p103, %p104
      %p106 = scmp.le.s32.totalorder 1, %s11
      %p107 = scmp.lt.s32.totalorder %s11, 3
      %p108 = pnand %p106, %p107
      %p109 = pneg %p108
      // Predicated region
      $region9: #{inner_product_decoder.1} parent=5 // pred_check
        _
      $region10: #{inner_product_decoder.1} parent=5 // pred_check_branch
        %111 = sbr.rel (%p108) target = $region12
      $region11: #{inner_product_decoder.1} parent=5 // pred_region
        %s112 = ssub.s32 %s11, 1
        // Predicated region
        $region13: #{inner_product_decoder.1} parent=11 // pred_check
          %p113 = pneg %p70
        $region14: #{inner_product_decoder.1} parent=11 // pred_check_branch
          %115 = sbr.rel (%p113) target = $region16
        $region15: #{inner_product_decoder.1} parent=11 // pred_region
          _
        $region16: #{inner_product_decoder.1} parent=11 // pred_fallthru
          _
      $region12: #{inner_product_decoder.1} parent=5 // pred_fallthru
        _
      %p116 = scmp.lt.s32.totalorder %s11, 2
      // Predicated region
      $region17: #{inner_product_decoder.1} parent=5 // pred_check
        %p117 = pneg %p116
      $region18: #{inner_product_decoder.1} parent=5 // pred_check_branch
        %119 = sbr.rel (%p117) target = $region20
      $region19: #{inner_product_decoder.1} parent=5 // pred_region
        // Predicated region
        $region21: #{inner_product_decoder.1} parent=19 // pred_check
          %p120 = pneg %p43
        $region22: #{inner_product_decoder.1} parent=19 // pred_check_branch
          %122 = sbr.rel (%p120) target = $region24
        $region23: #{inner_product_decoder.1} parent=19 // pred_region
          %s123 = smul.u32 16, %s18
          %p124 = scmp.lt.s32.totalorder %s123, 31
          %s125 = scalar_select %p124, %s123, 31
          %s126 = smul.addr %s125, 8
          %s127 = scalar_lea.vmem %s0, %s126
          %s128 = smul.u32 16, %s18
        $region24: #{inner_product_decoder.1} parent=19 // pred_fallthru
          _
      $region20: #{inner_product_decoder.1} parent=5 // pred_fallthru
        _
      %p129 = scmp.le.s32.totalorder 1, %s11
      %p130 = scmp.lt.s32.totalorder %s11, 3
      %p131 = pnand %p129, %p130
      %p132 = pneg %p131
      // Predicated region
      $region25: #{inner_product_decoder.1} parent=5 // pred_check
        _
      $region26: #{inner_product_decoder.1} parent=5 // pred_check_branch
        %134 = sbr.rel (%p131) target = $region28
      $region27: #{inner_product_decoder.1} parent=5 // pred_region
        %s135 = ssub.s32 %s11, 1
        %s136 = smul.u32 16, %s20
        %p137 = scmp.lt.s32.totalorder %s136, 31
        %s138 = scalar_select %p137, %s136, 31
        %s139 = smul.addr %s138, 8
        %s140 = scalar_lea.vmem %s0, %s139
        %p141 = pneg %p49
        %p142 = pneg %p46
        %p143 = pneg %p70
        %p144 = pneg %p67
        %p145 = pneg %p98
        %p146 = pneg %p95
        %s147 = sand.u32 %s85, 1
        %s148 = scalar_lea.sflag [#allocation3], %s147
        %s149 = sand.u32 %s85, 1
        %s150 = smul.addr %s149, 128
        %s151 = scalar_lea.vmem [#allocation2], %s150
        %s152 = smul.u32 16, %s20
        %p153 = scmp.lt.s32.totalorder %s152, 31
        %s154 = scalar_select %p153, %s152, 31
        %s155 = smul.addr %s154, 8
        %s156 = scalar_lea.vmem %s0, %s155
        %s157 = smul.u32 16, %s20
        %s158 = smul.u32 16, %s20
        %s159 = smul.u32 2, %s21
        %s161 = smul.u32 %s21, 256
        %v162 = vld [vmem:[%s156] sm:$0xff]
        %v163 = vld [vmem:[%s156 + $0x8] sm:$0xff]
        %v164 = vld [vmem:[%s156 + $0x10] sm:$0xff]
        %v165 = vld [vmem:[%s156 + $0x18] sm:$0xff]
        %v166 = vld [vmem:[%s156 + $0x20] sm:$0xff]
        %v167 = vld [vmem:[%s156 + $0x28] sm:$0xff]
        %v168 = vld [vmem:[%s156 + $0x30] sm:$0xff]
        %v169 = vld [vmem:[%s156 + $0x38] sm:$0xff]
        %v170 = vld [vmem:[%s156 + $0x40] sm:$0xff]
        %v171 = vld [vmem:[%s156 + $0x48] sm:$0xff]
        %v172 = vld [vmem:[%s156 + $0x50] sm:$0xff]
        %v173 = vld [vmem:[%s156 + $0x58] sm:$0xff]
        %v174 = vld [vmem:[%s156 + $0x60] sm:$0xff]
        %v175 = vld [vmem:[%s156 + $0x68] sm:$0xff]
        %v176 = vld [vmem:[%s156 + $0x70] sm:$0xff]
        %v177 = vld [vmem:[%s156 + $0x78] sm:$0xff]
        %s178 = sshra.s32 %s161, 7
        %s179 = sand.u32 %s161, 127
        %s180 = smul.addr %s178, 8
        %s181 = scalar_lea.vmem %s1, %s180
        %v182 = vld [vmem:[%s181] sm:$0xff]
        %v183 = vld [vmem:[%s181 + $0x8] sm:$0xff]
        %v184 = vld [vmem:[%s181 + $0x10] sm:$0xff]
        %v185 = vld [vmem:[%s181 + $0x18] sm:$0xff]
        %v186 = vld [vmem:[%s181 + $0x20] sm:$0xff]
        %v187 = vld [vmem:[%s181 + $0x28] sm:$0xff]
        %v188 = vld [vmem:[%s181 + $0x30] sm:$0xff]
        %v189 = vld [vmem:[%s181 + $0x38] sm:$0xff]
        %vm190 = vcmask 261120
        %v192 = vsel %vm190, %v162, 0
        %v195 = vsel %vm190, %v163, 0
        %v198 = vsel %vm190, %v164, 0
        %v201 = vsel %vm190, %v165, 0
        %v204 = vsel %vm190, %v166, 0
        %v207 = vsel %vm190, %v167, 0
        %v210 = vsel %vm190, %v168, 0
        %v213 = vsel %vm190, %v169, 0
        %v216 = vsel %vm190, %v170, 0
        %v219 = vsel %vm190, %v171, 0
        %v222 = vsel %vm190, %v172, 0
        %v225 = vsel %vm190, %v173, 0
        %v228 = vsel %vm190, %v174, 0
        %v231 = vsel %vm190, %v175, 0
        %v234 = vsel %vm190, %v176, 0
        %v237 = vsel %vm190, %v177, 0
        %239 = vmatprep.subr.mxu0 %v183
        %240 = vmatpush1.msra.mxu0 %v182
        %241 = vmatprep.subr.mxu0 %v185
        %242 = vmatpush1.msra.mxu0 %v184
        %243 = vmatprep.subr.mxu0 %v187
        %244 = vmatpush1.msra.mxu0 %v186
        %245 = vmatprep.subr.mxu0 %v189
        %246 = vmatpush1.msra.mxu0 %v188
        %247 = vmatprep.subr.mxu0 0.0
        %248 = vmatpush1.msra.mxu0 0.0
        %249 = vmatprep.subr.mxu0 0.0
        %250 = vmatpush1.msra.mxu0 0.0
        %251 = vmatprep.subr.mxu0 0.0
        %252 = vmatpush1.msra.mxu0 0.0
        %253 = vmatprep.subr.mxu0 0.0
        %254 = vmatpush1.msra.mxu0 0.0
        %255 = vmatprep.subr.mxu0 0.0
        %256 = vmatpush1.msra.mxu0 0.0
        %257 = vmatprep.subr.mxu0 0.0
        %258 = vmatpush1.msra.mxu0 0.0
        %259 = vmatprep.subr.mxu0 0.0
        %260 = vmatpush1.msra.mxu0 0.0
        %261 = vmatprep.subr.mxu0 0.0
        %262 = vmatpush1.msra.mxu0 0.0
        %263 = vmatprep.subr.mxu0 0.0
        %264 = vmatpush1.msra.mxu0 0.0
        %265 = vmatprep.subr.mxu0 0.0
        %266 = vmatpush1.msra.mxu0 0.0
        %267 = vmatprep.subr.mxu0 0.0
        %268 = vmatpush1.msra.mxu0 0.0
        %269 = vmatprep.subr.mxu0 0.0
        %270 = vmatpush1.msra.mxu0 0.0
        %271 = vmatprep.subr.mxu0 0.0
        %272 = vmatpush1.msra.mxu0 0.0
        %273 = vmatprep.subr.mxu0 0.0
        %274 = vmatpush1.msra.mxu0 0.0
        %275 = vmatprep.subr.mxu0 0.0
        %276 = vmatpush1.msra.mxu0 0.0
        %277 = vmatprep.subr.mxu0 0.0
        %278 = vmatpush1.msra.mxu0 0.0
        %279 = vmatprep.subr.mxu0 0.0
        %280 = vmatpush1.msra.mxu0 0.0
        %281 = vmatprep.subr.mxu0 0.0
        %282 = vmatpush1.msra.mxu0 0.0
        %283 = vmatprep.subr.mxu0 0.0
        %284 = vmatpush1.msra.mxu0 0.0
        %285 = vmatprep.subr.mxu0 0.0
        %286 = vmatpush1.msra.mxu0 0.0
        %287 = vmatprep.subr.mxu0 0.0
        %288 = vmatpush1.msra.mxu0 0.0
        %289 = vmatprep.subr.mxu0 0.0
        %290 = vmatpush1.msra.mxu0 0.0
        %291 = vmatprep.subr.mxu0 0.0
        %292 = vmatpush1.msra.mxu0 0.0
        %293 = vmatprep.subr.mxu0 0.0
        %294 = vmatpush1.msra.mxu0 0.0
        %295 = vmatprep.subr.mxu0 0.0
        %296 = vmatpush1.msra.mxu0 0.0
        %297 = vmatprep.subr.mxu0 0.0
        %298 = vmatpush1.msra.mxu0 0.0
        %299 = vmatprep.subr.mxu0 0.0
        %300 = vmatpush1.msra.mxu0 0.0
        %301 = vmatprep.subr.mxu0 0.0
        %302 = vmatpush1.msra.mxu0 0.0
        %303 = vmatprep.mubr.f32.mxu0 0.0
        %304 = vmatmul.mubr.f32.gmra.mrb[0].mxu0 %v192
        %v305 = vpop.f32.mrb[0].mxu0
        %v306 = vadd.f32 0.0, %v305
        %v307 = vpop.f32.mrb[0].mxu0
        %v308 = vadd.f32 0.0, %v307
        %309 = vmatprep.mubr.f32.mxu0 0.0
        %310 = vmatmul.mubr.f32.gmra.mrb[0].mxu0 %v195
        %v311 = vpop.f32.mrb[0].mxu0
        %v312 = vadd.f32 0.0, %v311
        %v313 = vpop.f32.mrb[0].mxu0
        %v314 = vadd.f32 0.0, %v313
        %315 = vmatprep.mubr.f32.mxu0 0.0
        %316 = vmatmul.mubr.f32.gmra.mrb[0].mxu0 %v198
        %v317 = vpop.f32.mrb[0].mxu0
        %v318 = vadd.f32 0.0, %v317
        %v319 = vpop.f32.mrb[0].mxu0
        %v320 = vadd.f32 0.0, %v319
        %321 = vmatprep.mubr.f32.mxu0 0.0
        %322 = vmatmul.mubr.f32.gmra.mrb[0].mxu0 %v201
        %v323 = vpop.f32.mrb[0].mxu0
        %v324 = vadd.f32 0.0, %v323
        %v325 = vpop.f32.mrb[0].mxu0
        %v326 = vadd.f32 0.0, %v325
        %327 = vmatprep.mubr.f32.mxu0 0.0
        %328 = vmatmul.mubr.f32.gmra.mrb[0].mxu0 %v204
        %v329 = vpop.f32.mrb[0].mxu0
        %v330 = vadd.f32 0.0, %v329
        %v331 = vpop.f32.mrb[0].mxu0
        %v332 = vadd.f32 0.0, %v331
        %333 = vmatprep.mubr.f32.mxu0 0.0
        %334 = vmatmul.mubr.f32.gmra.mrb[0].mxu0 %v207
        %v335 = vpop.f32.mrb[0].mxu0
        %v336 = vadd.f32 0.0, %v335
        %v337 = vpop.f32.mrb[0].mxu0
        %v338 = vadd.f32 0.0, %v337
        %339 = vmatprep.mubr.f32.mxu0 0.0
        %340 = vmatmul.mubr.f32.gmra.mrb[0].mxu0 %v210
        %v341 = vpop.f32.mrb[0].mxu0
        %v342 = vadd.f32 0.0, %v341
        %v343 = vpop.f32.mrb[0].mxu0
        %v344 = vadd.f32 0.0, %v343
        %345 = vmatprep.mubr.f32.mxu0 0.0
        %346 = vmatmul.mubr.f32.gmra.mrb[0].mxu0 %v213
        %v347 = vpop.f32.mrb[0].mxu0
        %v348 = vadd.f32 0.0, %v347
        %v349 = vpop.f32.mrb[0].mxu0
        %v350 = vadd.f32 0.0, %v349
        %351 = vmatprep.mubr.f32.mxu0 0.0
        %352 = vmatmul.mubr.f32.gmra.mrb[0].mxu0 %v216
        %v353 = vpop.f32.mrb[0].mxu0
        %v354 = vadd.f32 0.0, %v353
        %v355 = vpop.f32.mrb[0].mxu0
        %v356 = vadd.f32 0.0, %v355
        %357 = vmatprep.mubr.f32.mxu0 0.0
        %358 = vmatmul.mubr.f32.gmra.mrb[0].mxu0 %v219
        %v359 = vpop.f32.mrb[0].mxu0
        %v360 = vadd.f32 0.0, %v359
        %v361 = vpop.f32.mrb[0].mxu0
        %v362 = vadd.f32 0.0, %v361
        %363 = vmatprep.mubr.f32.mxu0 0.0
        %364 = vmatmul.mubr.f32.gmra.mrb[0].mxu0 %v222
        %v365 = vpop.f32.mrb[0].mxu0
        %v366 = vadd.f32 0.0, %v365
        %v367 = vpop.f32.mrb[0].mxu0
        %v368 = vadd.f32 0.0, %v367
        %369 = vmatprep.mubr.f32.mxu0 0.0
        %370 = vmatmul.mubr.f32.gmra.mrb[0].mxu0 %v225
        %v371 = vpop.f32.mrb[0].mxu0
        %v372 = vadd.f32 0.0, %v371
        %v373 = vpop.f32.mrb[0].mxu0
        %v374 = vadd.f32 0.0, %v373
        %375 = vmatprep.mubr.f32.mxu0 0.0
        %376 = vmatmul.mubr.f32.gmra.mrb[0].mxu0 %v228
        %v377 = vpop.f32.mrb[0].mxu0
        %v378 = vadd.f32 0.0, %v377
        %v379 = vpop.f32.mrb[0].mxu0
        %v380 = vadd.f32 0.0, %v379
        %381 = vmatprep.mubr.f32.mxu0 0.0
        %382 = vmatmul.mubr.f32.gmra.mrb[0].mxu0 %v231
        %v383 = vpop.f32.mrb[0].mxu0
        %v384 = vadd.f32 0.0, %v383
        %v385 = vpop.f32.mrb[0].mxu0
        %v386 = vadd.f32 0.0, %v385
        %387 = vmatprep.mubr.f32.mxu0 0.0
        %388 = vmatmul.mubr.f32.gmra.mrb[0].mxu0 %v234
        %v389 = vpop.f32.mrb[0].mxu0
        %v390 = vadd.f32 0.0, %v389
        %v391 = vpop.f32.mrb[0].mxu0
        %v392 = vadd.f32 0.0, %v391
        %393 = vmatprep.mubr.f32.mxu0 0.0
        %394 = vmatmul.mubr.f32.gmra.mrb[0].mxu0 %v237
        %v395 = vpop.f32.mrb[0].mxu0
        %v396 = vadd.f32 0.0, %v395
        %v397 = vpop.f32.mrb[0].mxu0
        %v398 = vadd.f32 0.0, %v397
        %399 = vdwg.mxu0
        %v400 = vpack.c.bf16 %v312, %v306
        %v401 = vpack.c.bf16 %v314, %v308
        %v402 = vpack.c.bf16 %v324, %v318
        %v403 = vpack.c.bf16 %v326, %v320
        %v404 = vpack.c.bf16 %v336, %v330
        %v405 = vpack.c.bf16 %v338, %v332
        %v406 = vpack.c.bf16 %v348, %v342
        %v407 = vpack.c.bf16 %v350, %v344
        %v408 = vpack.c.bf16 %v360, %v354
        %v409 = vpack.c.bf16 %v362, %v356
        %v410 = vpack.c.bf16 %v372, %v366
        %v411 = vpack.c.bf16 %v374, %v368
        %v412 = vpack.c.bf16 %v384, %v378
        %v413 = vpack.c.bf16 %v386, %v380
        %v414 = vpack.c.bf16 %v396, %v390
        %v415 = vpack.c.bf16 %v398, %v392
        %v416 = vxor.u32 %v400, 2147516416
        %v417 = vxor.u32 %v401, 2147516416
        %v418 = vxor.u32 %v402, 2147516416
        %v419 = vxor.u32 %v403, 2147516416
        %v420 = vxor.u32 %v404, 2147516416
        %v421 = vxor.u32 %v405, 2147516416
        %v422 = vxor.u32 %v406, 2147516416
        %v423 = vxor.u32 %v407, 2147516416
        %v424 = vxor.u32 %v408, 2147516416
        %v425 = vxor.u32 %v409, 2147516416
        %v426 = vxor.u32 %v410, 2147516416
        %v427 = vxor.u32 %v411, 2147516416
        %v428 = vxor.u32 %v412, 2147516416
        %v429 = vxor.u32 %v413, 2147516416
        %v430 = vxor.u32 %v414, 2147516416
        %v431 = vxor.u32 %v415, 2147516416
        %v433 = vmul.bf16 %v416, 1069105081
        %v434 = vpow.bf16.pop %v433
        %v436 = vmul.bf16 %v417, 1069105081
        %v437 = vpow.bf16.pop %v436
        %v439 = vmul.bf16 %v418, 1069105081
        %v440 = vpow.bf16.pop %v439
        %v442 = vmul.bf16 %v419, 1069105081
        %v443 = vpow.bf16.pop %v442
        %v445 = vmul.bf16 %v420, 1069105081
        %v446 = vpow.bf16.pop %v445
        %v448 = vmul.bf16 %v421, 1069105081
        %v449 = vpow.bf16.pop %v448
        %v451 = vmul.bf16 %v422, 1069105081
        %v452 = vpow.bf16.pop %v451
        %v454 = vmul.bf16 %v423, 1069105081
        %v455 = vpow.bf16.pop %v454
        %v457 = vmul.bf16 %v424, 1069105081
        %v458 = vpow.bf16.pop %v457
        %v460 = vmul.bf16 %v425, 1069105081
        %v461 = vpow.bf16.pop %v460
        %v463 = vmul.bf16 %v426, 1069105081
        %v464 = vpow.bf16.pop %v463
        %v466 = vmul.bf16 %v427, 1069105081
        %v467 = vpow.bf16.pop %v466
        %v469 = vmul.bf16 %v428, 1069105081
        %v470 = vpow.bf16.pop %v469
        %v472 = vmul.bf16 %v429, 1069105081
        %v473 = vpow.bf16.pop %v472
        %v475 = vmul.bf16 %v430, 1069105081
        %v476 = vpow.bf16.pop %v475
        %v478 = vmul.bf16 %v431, 1069105081
        %v479 = vpow.bf16.pop %v478
        %v480 = vadd.bf16 %v434, 1065369472
        %v481 = vadd.bf16 %v437, 1065369472
        %v482 = vadd.bf16 %v440, 1065369472
        %v483 = vadd.bf16 %v443, 1065369472
        %v484 = vadd.bf16 %v446, 1065369472
        %v485 = vadd.bf16 %v449, 1065369472
        %v486 = vadd.bf16 %v452, 1065369472
        %v487 = vadd.bf16 %v455, 1065369472
        %v488 = vadd.bf16 %v458, 1065369472
        %v489 = vadd.bf16 %v461, 1065369472
        %v490 = vadd.bf16 %v464, 1065369472
        %v491 = vadd.bf16 %v467, 1065369472
        %v492 = vadd.bf16 %v470, 1065369472
        %v493 = vadd.bf16 %v473, 1065369472
        %v494 = vadd.bf16 %v476, 1065369472
        %v495 = vadd.bf16 %v479, 1065369472
        %v496 = vrcp.bf16.pop %v480
        %v497 = vmul.bf16 1065369472, %v496
        %v498 = vrcp.bf16.pop %v481
        %v499 = vmul.bf16 1065369472, %v498
        %v500 = vrcp.bf16.pop %v482
        %v501 = vmul.bf16 1065369472, %v500
        %v502 = vrcp.bf16.pop %v483
        %v503 = vmul.bf16 1065369472, %v502
        %v504 = vrcp.bf16.pop %v484
        %v505 = vmul.bf16 1065369472, %v504
        %v506 = vrcp.bf16.pop %v485
        %v507 = vmul.bf16 1065369472, %v506
        %v508 = vrcp.bf16.pop %v486
        %v509 = vmul.bf16 1065369472, %v508
        %v510 = vrcp.bf16.pop %v487
        %v511 = vmul.bf16 1065369472, %v510
        %v512 = vrcp.bf16.pop %v488
        %v513 = vmul.bf16 1065369472, %v512
        %v514 = vrcp.bf16.pop %v489
        %v515 = vmul.bf16 1065369472, %v514
        %v516 = vrcp.bf16.pop %v490
        %v517 = vmul.bf16 1065369472, %v516
        %v518 = vrcp.bf16.pop %v491
        %v519 = vmul.bf16 1065369472, %v518
        %v520 = vrcp.bf16.pop %v492
        %v521 = vmul.bf16 1065369472, %v520
        %v522 = vrcp.bf16.pop %v493
        %v523 = vmul.bf16 1065369472, %v522
        %v524 = vrcp.bf16.pop %v494
        %v525 = vmul.bf16 1065369472, %v524
        %v526 = vrcp.bf16.pop %v495
        %v527 = vmul.bf16 1065369472, %v526
        %v544 = vunpack.c.l.b16 %v497
        %v545 = vunpack.c.l.b16 %v499
        %v546 = vunpack.c.h.b16 %v497
        %v547 = vunpack.c.h.b16 %v499
        %v548 = vunpack.c.l.b16 %v501
        %v549 = vunpack.c.l.b16 %v503
        %v550 = vunpack.c.h.b16 %v501
        %v551 = vunpack.c.h.b16 %v503
        %v552 = vunpack.c.l.b16 %v505
        %v553 = vunpack.c.l.b16 %v507
        %v554 = vunpack.c.h.b16 %v505
        %v555 = vunpack.c.h.b16 %v507
        %v556 = vunpack.c.l.b16 %v509
        %v557 = vunpack.c.l.b16 %v511
        %v558 = vunpack.c.h.b16 %v509
        %v559 = vunpack.c.h.b16 %v511
        %v560 = vunpack.c.l.b16 %v513
        %v561 = vunpack.c.l.b16 %v515
        %v562 = vunpack.c.h.b16 %v513
        %v563 = vunpack.c.h.b16 %v515
        %v564 = vunpack.c.l.b16 %v517
        %v565 = vunpack.c.l.b16 %v519
        %v566 = vunpack.c.h.b16 %v517
        %v567 = vunpack.c.h.b16 %v519
        %v568 = vunpack.c.l.b16 %v521
        %v569 = vunpack.c.l.b16 %v523
        %v570 = vunpack.c.h.b16 %v521
        %v571 = vunpack.c.h.b16 %v523
        %v572 = vunpack.c.l.b16 %v525
        %v573 = vunpack.c.l.b16 %v527
        %v574 = vunpack.c.h.b16 %v525
        %v575 = vunpack.c.h.b16 %v527
        %v576 = vpack.c.b16 %v545, %v544
        %v577 = vpack.c.b16 %v547, %v546
        %v578 = vpack.c.b16 %v549, %v548
        %v579 = vpack.c.b16 %v551, %v550
        %v580 = vpack.c.b16 %v553, %v552
        %v581 = vpack.c.b16 %v555, %v554
        %v582 = vpack.c.b16 %v557, %v556
        %v583 = vpack.c.b16 %v559, %v558
        %v584 = vpack.c.b16 %v561, %v560
        %v585 = vpack.c.b16 %v563, %v562
        %v586 = vpack.c.b16 %v565, %v564
        %v587 = vpack.c.b16 %v567, %v566
        %v588 = vpack.c.b16 %v569, %v568
        %v589 = vpack.c.b16 %v571, %v570
        %v590 = vpack.c.b16 %v573, %v572
        %v591 = vpack.c.b16 %v575, %v574
        %608 = vst [vmem:[%s151] sm:$0xff] %v576
        %609 = vst [vmem:[%s151 + $0x8] sm:$0xff] %v577
        %610 = vst [vmem:[%s151 + $0x10] sm:$0xff] %v578
        %611 = vst [vmem:[%s151 + $0x18] sm:$0xff] %v579
        %612 = vst [vmem:[%s151 + $0x20] sm:$0xff] %v580
        %613 = vst [vmem:[%s151 + $0x28] sm:$0xff] %v581
        %614 = vst [vmem:[%s151 + $0x30] sm:$0xff] %v582
        %615 = vst [vmem:[%s151 + $0x38] sm:$0xff] %v583
        %616 = vst [vmem:[%s151 + $0x40] sm:$0xff] %v584
        %617 = vst [vmem:[%s151 + $0x48] sm:$0xff] %v585
        %618 = vst [vmem:[%s151 + $0x50] sm:$0xff] %v586
        %619 = vst [vmem:[%s151 + $0x58] sm:$0xff] %v587
        %620 = vst [vmem:[%s151 + $0x60] sm:$0xff] %v588
        %621 = vst [vmem:[%s151 + $0x68] sm:$0xff] %v589
        %622 = vst [vmem:[%s151 + $0x70] sm:$0xff] %v590
        %623 = vst [vmem:[%s151 + $0x78] sm:$0xff] %v591
        %s624 = sand.u32 %s85, 1
        %s625 = scalar_lea.sflag [#allocation3], %s624
        %s626 = sand.u32 %s85, 1
        %s627 = smul.addr %s626, 128
        %s628 = scalar_lea.vmem [#allocation2], %s627
        // Predicated region
        $region29: #{inner_product_decoder.1} parent=27 // pred_check
          %p629 = pneg %p95
        $region30: #{inner_product_decoder.1} parent=27 // pred_check_branch
          %631 = sbr.rel (%p629) target = $region32
        $region31: #{inner_product_decoder.1} parent=27 // pred_region
          %s632 = smul.u32 16, %s20
          %s633 = smul.u32 2, %s21
          %s635 = ssub.s32 2048, 2048
          %636 = vsyncadd %s625, %s635
          %s637 = smul.addr %s632, 2
          %s638 = sadd.s32 %s633, %s637
          %s639 = smul.addr %s638, 64
          %s640 = scalar_lea.hbm %s2, %s639
          %s641 = sshll.u32 %s628, 4
          %s642 = int_to_ptr.vmem [resolvable:$true] %s641
          %647 = dma.vmem_to_hbm [thread:$0]  %s642, 2048, %s640, %s625, 128, 128, 8
        $region32: #{inner_product_decoder.1} parent=27 // pred_fallthru
          _
      $region28: #{inner_product_decoder.1} parent=5 // pred_fallthru
        _
      %p648 = scmp.le.s32.totalorder 2, %s11
      // Predicated region
      $region33: #{inner_product_decoder.1} parent=5 // pred_check
        %p649 = pneg %p648
      $region34: #{inner_product_decoder.1} parent=5 // pred_check_branch
        %651 = sbr.rel (%p649) target = $region36
      $region35: #{inner_product_decoder.1} parent=5 // pred_region
        %s652 = ssub.s32 %s11, 2
        // Predicated region
        $region37: #{inner_product_decoder.1} parent=35 // pred_check
          %p653 = pneg %p101
        $region38: #{inner_product_decoder.1} parent=35 // pred_check_branch
          %655 = sbr.rel (%p653) target = $region40
        $region39: #{inner_product_decoder.1} parent=35 // pred_region
          %s656 = sand.u32 %s86, 1
          %s657 = scalar_lea.sflag [#allocation3], %s656
          %s658 = sand.u32 %s86, 1
          %s659 = smul.addr %s658, 128
          %s660 = scalar_lea.vmem [#allocation2], %s659
          %661 = dma.done %s657, 2048
        $region40: #{inner_product_decoder.1} parent=35 // pred_fallthru
          _
      $region36: #{inner_product_decoder.1} parent=5 // pred_fallthru
        _
    $region6: #{inner_product_decoder.1} parent=1 // loop_footer
      %s15 = sadd.s32 1, %s11
    $region7: #{inner_product_decoder.1} parent=1 // loop_footer_branch
      %10 = sbr.rel target = $region3
    $region8: #{inner_product_decoder.1} parent=1 // loop_exit
      _
    %662 = vsyncpa [#allocation3], 1
    %s663 = scalar_lea.sflag [#allocation3], 1
    %664 = vsyncpa %s663, 1

</llo_original>
